<compile_context>
chip_gen: v5e
topology: v5e:2x2
jax: 0.10.0
libtpu: 0.0.40
codegen_flags: <defaults>
</compile_context>

<pallas_src>
import math

import jax
import jax.numpy as jnp
from jax import lax
from jax.experimental import pallas as pl
from jax.experimental.pallas import tpu as pltpu

LANE = 128  # output chunk width / MXU N


def _round_up(x: int, m: int) -> int:
    return ((x + m - 1) // m) * m


def _cdiv(a: int, b: int) -> int:
    return -(-a // b)


def make_lowpass_filter(cutoff: float, zeros: float = 8.0):
    """Windowed-sinc lowpass FIR, identical to LowPassFiltersNew.__init__ (deterministic)."""
    if cutoff <= 0.0 or cutoff > 0.5:
        # TODO(synk): cutoff == 0 ("null filter" convention) not implemented (the reference
        # __init__ itself divides by zero for cutoff == 0).
        raise ValueError("cutoff must be in (0, 0.5]")
    half = int(zeros / cutoff / 2)
    n = 2 * half + 1
    if n == 1:
        window = jnp.ones((1,), jnp.float32)
    else:
        idx = jnp.arange(n, dtype=jnp.float32)
        window = 0.5 * (1.0 - jnp.cos(2.0 * math.pi * idx / (n - 1)))
    t = jnp.arange(-half, half + 1, dtype=jnp.float32)
    # julius sinc(x) = sin(x)/x  ==  jnp.sinc(x/pi)  =>  sinc(2*pi*c*t) = jnp.sinc(2*c*t)
    filt = 2.0 * cutoff * window * jnp.sinc(2.0 * cutoff * t)
    filt = filt / jnp.sum(filt)
    return filt.astype(jnp.float32), half


def _make_kernel(*, n_chunks, p_min, p_max, halo, tt, n_tt,
                 last_valid_x, valid_out_last, prev_vr):
    """Kernel for one (row tile, time tile) grid step."""
    head = -p_min      # leading chunks that may read the left edge buffer
    tail = p_max       # trailing chunks that may read the right edge buffer

    # Garbage region of the (ragged) last input tile that can be seen by chunks producing
    # valid outputs; it must be replicate-filled (NaN * 0 == NaN on the MXU).
    fix_lo = last_valid_x
    fix_hi = min(tt, (_cdiv(valid_out_last, LANE) + p_max) * LANE)
    fix_needed = (last_valid_x < tt) and (fix_hi > fix_lo)

    def kernel(band_ref, x_ref, xl_ref, xr_ref, out_ref, lbuf_ref, rbuf_ref):
        j = pl.program_id(1)
        rows = x_ref.shape[0]
        cdt = lbuf_ref.dtype  # bf16 compute dtype

        # ---------------- left extension: x_local columns [-halo, 0) ----------------
        if head > 0:
            @pl.when(j == 0)
            def _():
                lbuf_ref[...] = jnp.broadcast_to(x_ref[:, 0:1], (rows, halo)).astype(cdt)

            @pl.when(j > 0)
            def _():
                lbuf_ref[...] = xl_ref[...].astype(cdt)

        # --------------- right extension: x_local columns [tt, tt+halo) -------------
        # Only the last two time tiles can need replicate values; their boundaries are
        # static Python ints, so every slice below has a static width.
        if n_tt >= 3:
            @pl.when(j < n_tt - 2)
            def _():
                rbuf_ref[...] = xr_ref[...].astype(cdt)

        if n_tt >= 2:
            @pl.when(j == n_tt - 2)
            def _():
                if prev_vr >= halo:
                    rbuf_ref[...] = xr_ref[...].astype(cdt)
                else:
                    edge = xr_ref[:, prev_vr - 1:prev_vr]
                    rbuf_ref[:, :prev_vr] = xr_ref[:, :prev_vr].astype(cdt)
                    rbuf_ref[:, prev_vr:] = jnp.broadcast_to(
                        edge, (rows, halo - prev_vr)).astype(cdt)

        @pl.when(j == n_tt - 1)
        def _():
            if last_valid_x >= tt + halo:
                rbuf_ref[...] = xr_ref[...].astype(cdt)
            else:
                vr = max(last_valid_x - tt, 0)
                if vr > 0:
                    edge = xr_ref[:, vr - 1:vr]
                    rbuf_ref[:, :vr] = xr_ref[:, :vr].astype(cdt)
                else:
                    edge = x_ref[:, last_valid_x - 1:last_valid_x]
                rbuf_ref[:, vr:] = jnp.broadcast_to(edge, (rows, halo - vr)).astype(cdt)
                if fix_needed:
                    # Replicate-fill the garbage tail of the partial input block (static
                    # slice, executed only on the last time tile).
                    x_ref[:, fix_lo:fix_hi] = jnp.broadcast_to(
                        edge, (rows, fix_hi - fix_lo)).astype(x_ref.dtype)

        # ------------------- FIR via banded-Toeplitz MXU matmuls --------------------
        def band_mat(p):
            q = p - p_min
            return band_ref[q * LANE:(q + 1) * LANE, :]

        def slice_static(s):
            if s < 0:
                c0 = s * LANE + halo
                return lbuf_ref[:, c0:c0 + LANE]
            if s >= n_chunks:
                c0 = (s - n_chunks) * LANE
                return rbuf_ref[:, c0:c0 + LANE]
            return x_ref[:, s * LANE:(s + 1) * LANE].astype(cdt)

        def compute_chunk(c, get_slice):
            acc = None
            for p in range(p_min, p_max + 1):
                contrib = jnp.dot(get_slice(c, p), band_mat(p),
                                  preferred_element_type=jnp.float32)
                acc = contrib if acc is None else acc + contrib
            return acc

        def chunk_static(c):
            acc = compute_chunk(c, lambda c_, p: slice_static(c_ + p))
            out_ref[:, c * LANE:(c + 1) * LANE] = acc.astype(out_ref.dtype)

        def chunk_dynamic(c):  # interior: all slices live inside the current block
            def get_slice(c_, p):
                start = pl.multiple_of((c_ + p) * LANE, LANE)
                return x_ref[:, pl.ds(start, LANE)].astype(cdt)
            acc = compute_chunk(c, get_slice)
            o_start = pl.multiple_of(c * LANE, LANE)
            out_ref[:, pl.ds(o_start, LANE)] = acc.astype(out_ref.dtype)

        if n_chunks <= max(16, head + tail + 1):
            for c in range(n_chunks):
                chunk_static(c)
        else:
            for c in range(head):
                chunk_static(c)

            def body(c, carry):
                chunk_dynamic(c)
                return carry

            lax.fori_loop(head, n_chunks - tail, body, 0, unroll=4)
            for c in range(n_chunks - tail, n_chunks):
                chunk_static(c)

    return kernel


def lowpass_filters(x, cutoff: float, stride: int = 1, pad: bool = True, zeros: float = 8.0):
    """Pallas equivalent of LowPassFiltersNew.forward. Input [*, T] -> output [1, *, T']."""
    if stride != 1:
        raise NotImplementedError("stride > 1")  # TODO(synk): strided decimation path
    filt, half = make_lowpass_filter(cutoff, zeros)
    k = 2 * half + 1

    shape = list(x.shape)
    t_in = int(shape[-1])
    xf = x.reshape(-1, t_in)
    b = xf.shape[0]

    shift = half if pad else 0
    t_out = t_in if pad else t_in - (k - 1)
    assert t_out > 0, "signal shorter than filter with pad=False"

    p_min = -_cdiv(shift, LANE) if shift > 0 else 0
    p_max = (LANE - 1 + (k - 1) - shift) // LANE
    halo = LANE * max(1, -p_min, p_max)

    # Banded-Toeplitz taps, one (128,128) block per 128-lane shift p (bf16, MXU-native):
    #   out[:, m] = sum_d w[d] * x[m + d - shift]   ->   B_p[r, u] = w[p*128 + r - u + shift]
    r = jnp.arange(LANE, dtype=jnp.int32)[:, None]
    u = jnp.arange(LANE, dtype=jnp.int32)[None, :]
    mats = []
    for p in range(p_min, p_max + 1):
        d = p * LANE + r - u + shift
        mats.append(jnp.where((d >= 0) & (d < k), filt[jnp.clip(d, 0, k - 1)], 0.0))
    band = jnp.concatenate(mats, axis=0).astype(jnp.bfloat16)

    in_b = jnp.dtype(x.dtype).itemsize

    # Generation-aware VMEM budget (v5e/v6e: 128 MiB -> ~92 MiB, v7x: 64 MiB -> ~46 MiB).
    try:
        phys = int(getattr(pltpu.get_tpu_info(), "vmem_capacity_bytes", 0)) or (64 << 20)
    except Exception:  # pragma: no cover - defensive fallback
        phys = 64 << 20
    budget = int(phys * 0.72)

    tt_cap = halo * max(1, 4096 // halo)
    tt = min(_round_up(t_out, halo), tt_cap)
    rt = b if b <= 256 else min(256, _round_up(_cdiv(b, _cdiv(b, 256)), 8))

    def vmem_need(rt_, tt_):
        return (2 * rt_ * tt_ * in_b            # input tile, double buffered
                + 4 * rt_ * halo * in_b         # two halo tiles, double buffered
                + 2 * rt_ * tt_ * in_b          # output tile, double buffered
                + 2 * rt_ * halo * 2            # bf16 edge scratch
                + 2 * band.size * 2             # taps
                + rt_ * LANE * 4 * 8            # matmul temporaries
                + (1 << 20))                    # slack

    while vmem_need(rt, tt) > budget and rt > 64:
        rt = max(64, _round_up(rt // 2, 8))
    while vmem_need(rt, tt) > budget and tt > max(halo, 1024):
        tt = max(halo, (tt // (2 * halo)) * halo)
    while vmem_need(rt, tt) > budget and rt > 8:
        rt = max(8, _round_up(rt // 2, 8))
    while vmem_need(rt, tt) > budget and tt > halo:
        tt = max(halo, (tt // (2 * halo)) * halo)

    n_rt, n_tt = _cdiv(b, rt), _cdiv(t_out, tt)
    # v7x has 2 TensorCores: give the parallel grid something to split when possible.
    if n_rt * n_tt < 2:
        if b >= 16:
            rt_half = _round_up(_cdiv(b, 2), 8)
            if rt_half < b:
                rt = rt_half
        elif t_out > halo and tt > halo:
            tt_half = _round_up(_cdiv(t_out, 2), halo)
            if tt_half < tt:
                tt = tt_half
        n_rt, n_tt = _cdiv(b, rt), _cdiv(t_out, tt)

    n_chunks = tt // LANE
    last_valid_x = t_in - (n_tt - 1) * tt          # real input columns in the last tile
    valid_out_last = t_out - (n_tt - 1) * tt       # valid output columns in the last tile
    prev_vr = min(max(last_valid_x, 0), halo)      # real right-halo cols at tile n_tt-2

    R = tt // halo
    nhb = _cdiv(t_in, halo)

    kernel = _make_kernel(n_chunks=n_chunks, p_min=p_min, p_max=p_max, halo=halo,
                          tt=tt, n_tt=n_tt, last_valid_x=last_valid_x,
                          valid_out_last=valid_out_last, prev_vr=prev_vr)

    vmem_limit = int(min(int(phys * 0.80),
                         max(vmem_need(rt, tt) + (8 << 20), 32 << 20)))

    out = pl.pallas_call(
        kernel,
        out_shape=jax.ShapeDtypeStruct((b, t_out), x.dtype),
        grid=(n_rt, n_tt),
        in_specs=[
            pl.BlockSpec(band.shape, lambda i, j: (0, 0)),                  # taps (resident)
            pl.BlockSpec((rt, tt), lambda i, j: (i, j)),                    # signal tile
            pl.BlockSpec((rt, halo),
                         lambda i, j: (i, jnp.maximum(j * R - 1, 0))),      # left halo
            pl.BlockSpec((rt, halo),
                         lambda i, j: (i, jnp.minimum((j + 1) * R, nhb - 1))),  # right halo
        ],
        out_specs=pl.BlockSpec((rt, tt), lambda i, j: (i, j)),
        scratch_shapes=[pltpu.VMEM((rt, halo), jnp.bfloat16),   # left edge buffer
                        pltpu.VMEM((rt, halo), jnp.bfloat16)],  # right edge buffer
        compiler_params=pltpu.CompilerParams(
            dimension_semantics=("parallel", "parallel"),
            vmem_limit_bytes=vmem_limit),
    )(band, xf, xf, xf)

    # PyTorch: conv1d -> (B, 1, T'); permute(1,0,2) -> (1, B, T'); reshape to [1, *lead, T']
    return out.reshape([1] + shape[:-1] + [t_out])


if __name__ == "__main__":
    key = jax.random.PRNGKey(0)
    x = jax.random.normal(key, (2, 4, 64), dtype=jnp.float32)   # [*, T]
    cutoff = 0.25            # -> half_size = 16, filter length 33 (fft=False path)

    y = lowpass_filters(x, cutoff, stride=1, pad=True, zeros=8.0)
    y = jax.block_until_ready(y)
    assert y.shape == (1, 2, 4, 64), y.shape

    # pure-JAX exact-f32 reference (same semantics as F.conv1d on replicate-padded input)
    filt, hs = make_lowpass_filter(cutoff)
    xr_ = x.reshape(-1, 64)
    xp = jnp.pad(xr_, ((0, 0), (hs, hs)), mode="edge")
    ref = jnp.zeros_like(xr_)
    for kk in range(2 * hs + 1):
        ref = ref + filt[kk] * xp[:, kk:kk + 64]
    ref = ref.reshape(1, 2, 4, 64)

    # Tolerance accommodates the bf16 MXU path (f32 accumulation).
    err = float(jnp.max(jnp.abs(y - ref)))
    assert jnp.allclose(y, ref, atol=1e-2, rtol=1e-2), err

    print("KERNEL_OK")
</pallas_src>

<mosaic_0001>
module attributes {stable_mosaic.version = 11 : i64} {
  func.func @kernel(%arg0: i32, %arg1: i32, %arg2: memref<384x128xbf16, #tpu.memory_space<vmem>>, %arg3: memref<8x128xf32, #tpu.memory_space<vmem>>, %arg4: memref<8x128xf32, #tpu.memory_space<vmem>>, %arg5: memref<8x128xf32, #tpu.memory_space<vmem>>, %arg6: memref<8x128xf32, #tpu.memory_space<vmem>>, %arg7: memref<8x128xbf16, #tpu.memory_space<vmem>>, %arg8: memref<8x128xbf16, #tpu.memory_space<vmem>>) attributes {dimension_semantics = [#tpu.dimension_semantics<parallel>, #tpu.dimension_semantics<parallel>], iteration_bounds = array<i64: 1, 1>, scalar_prefetch = 0 : i64, scratch_operands = 2 : i64, tpu.core_type = #tpu.core_type<tc>, window_params = [{pipeline_mode = #tpu.pipeline_mode<synchronous>, transform_indices = @transform_0, window_bounds = array<i64: 384, 128>}, {transform_indices = @transform_1, window_bounds = array<i64: 8, 128>}, {transform_indices = @transform_2, window_bounds = array<i64: 8, 128>}, {transform_indices = @transform_3, window_bounds = array<i64: 8, 128>}, {transform_indices = @transform_4, window_bounds = array<i64: 8, 128>}]} {
    %c0_i32 = arith.constant 0 : i32
    %0 = arith.cmpi eq, %arg1, %c0_i32 : i32
    %1 = arith.extui %0 : i1 to i32
    %c0_i32_0 = arith.constant 0 : i32
    %2 = arith.cmpi ne, %1, %c0_i32_0 : i32
    scf.if %2 {
      %c0_18 = arith.constant 0 : index
      %c0_19 = arith.constant 0 : index
      %22 = vector.load %arg3[%c0_18, %c0_19] : memref<8x128xf32, #tpu.memory_space<vmem>>, vector<8x1xf32>
      %23 = vector.shape_cast %22 : vector<8x1xf32> to vector<8x1xf32>
      %24 = vector.broadcast %23 : vector<8x1xf32> to vector<8x128xf32>
      %25 = arith.truncf %24 : vector<8x128xf32> to vector<8x128xbf16>
      %c0_20 = arith.constant 0 : index
      %c0_21 = arith.constant 0 : index
      %26 = vector.load %arg7[%c0_20, %c0_21] : memref<8x128xbf16, #tpu.memory_space<vmem>>, vector<8x128xbf16>
      tpu.vector_store %arg7[%c0_20, %c0_21], %25 {strides = array<i32>} : memref<8x128xbf16, #tpu.memory_space<vmem>>, vector<8x128xbf16>,
    } else {
    }
    %c0_i32_1 = arith.constant 0 : i32
    %3 = arith.cmpi sgt, %arg1, %c0_i32_1 : i32
    %4 = arith.extui %3 : i1 to i32
    %c0_i32_2 = arith.constant 0 : i32
    %5 = arith.cmpi ne, %4, %c0_i32_2 : i32
    scf.if %5 {
      %c0_18 = arith.constant 0 : index
      %c0_19 = arith.constant 0 : index
      %22 = vector.load %arg4[%c0_18, %c0_19] : memref<8x128xf32, #tpu.memory_space<vmem>>, vector<8x128xf32>
      %23 = arith.truncf %22 : vector<8x128xf32> to vector<8x128xbf16>
      %c0_20 = arith.constant 0 : index
      %c0_21 = arith.constant 0 : index
      %24 = vector.load %arg7[%c0_20, %c0_21] : memref<8x128xbf16, #tpu.memory_space<vmem>>, vector<8x128xbf16>
      tpu.vector_store %arg7[%c0_20, %c0_21], %23 {strides = array<i32>} : memref<8x128xbf16, #tpu.memory_space<vmem>>, vector<8x128xbf16>,
    } else {
    }
    %c0_i32_3 = arith.constant 0 : i32
    %6 = arith.cmpi eq, %arg1, %c0_i32_3 : i32
    %7 = arith.extui %6 : i1 to i32
    %c0_i32_4 = arith.constant 0 : i32
    %8 = arith.cmpi ne, %7, %c0_i32_4 : i32
    scf.if %8 {
      %c0_18 = arith.constant 0 : index
      %c63 = arith.constant 63 : index
      %22 = vector.load %arg3[%c0_18, %c63] : memref<8x128xf32, #tpu.memory_space<vmem>>, vector<8x1xf32>
      %23 = vector.shape_cast %22 : vector<8x1xf32> to vector<8x1xf32>
      %24 = vector.broadcast %23 : vector<8x1xf32> to vector<8x128xf32>
      %25 = arith.truncf %24 : vector<8x128xf32> to vector<8x128xbf16>
      %c0_19 = arith.constant 0 : index
      %c0_20 = arith.constant 0 : index
      %26 = vector.load %arg8[%c0_19, %c0_20] : memref<8x128xbf16, #tpu.memory_space<vmem>>, vector<8x128xbf16>
      tpu.vector_store %arg8[%c0_19, %c0_20], %25 {strides = array<i32>} : memref<8x128xbf16, #tpu.memory_space<vmem>>, vector<8x128xbf16>,
      %27 = vector.shape_cast %22 : vector<8x1xf32> to vector<8x1xf32>
      %28 = vector.broadcast %27 : vector<8x1xf32> to vector<8x64xf32>
      %c0_21 = arith.constant 0 : index
      %c64 = arith.constant 64 : index
      %29 = vector.load %arg3[%c0_21, %c64] : memref<8x128xf32, #tpu.memory_space<vmem>>, vector<8x64xf32>
      tpu.vector_store %arg3[%c0_21, %c64], %28 {strides = array<i32>} : memref<8x128xf32, #tpu.memory_space<vmem>>, vector<8x64xf32>,
    } else {
    }
    %c0 = arith.constant 0 : index
    %c0_5 = arith.constant 0 : index
    %9 = vector.load %arg7[%c0, %c0_5] : memref<8x128xbf16, #tpu.memory_space<vmem>>, vector<8x128xbf16>
    %c0_6 = arith.constant 0 : index
    %c0_7 = arith.constant 0 : index
    %10 = vector.load %arg2[%c0_6, %c0_7] : memref<384x128xbf16, #tpu.memory_space<vmem>>, vector<128x128xbf16>
    %cst = arith.constant dense<0.000000e+00> : vector<8x128xf32>
    %11 = tpu.matmul %9, %10, %cst {dimension_numbers = #tpu.dot_dimension_numbers<[1], [0], [0], [1], [0, 0, 1, 1], [], []>} : vector<8x128xbf16>, vector<128x128xbf16>, vector<8x128xf32> -> vector<8x128xf32>
    %c0_8 = arith.constant 0 : index
    %c0_9 = arith.constant 0 : index
    %12 = vector.load %arg3[%c0_8, %c0_9] : memref<8x128xf32, #tpu.memory_space<vmem>>, vector<8x128xf32>
    %13 = arith.truncf %12 : vector<8x128xf32> to vector<8x128xbf16>
    %c128 = arith.constant 128 : index
    %c0_10 = arith.constant 0 : index
    %14 = vector.load %arg2[%c128, %c0_10] : memref<384x128xbf16, #tpu.memory_space<vmem>>, vector<128x128xbf16>
    %cst_11 = arith.constant dense<0.000000e+00> : vector<8x128xf32>
    %15 = tpu.matmul %13, %14, %cst_11 {dimension_numbers = #tpu.dot_dimension_numbers<[1], [0], [0], [1], [0, 0, 1, 1], [], []>} : vector<8x128xbf16>, vector<128x128xbf16>, vector<8x128xf32> -> vector<8x128xf32>
    %16 = arith.addf %11, %15 : vector<8x128xf32>
    %c0_12 = arith.constant 0 : index
    %c0_13 = arith.constant 0 : index
    %17 = vector.load %arg8[%c0_12, %c0_13] : memref<8x128xbf16, #tpu.memory_space<vmem>>, vector<8x128xbf16>
    %c256 = arith.constant 256 : index
    %c0_14 = arith.constant 0 : index
    %18 = vector.load %arg2[%c256, %c0_14] : memref<384x128xbf16, #tpu.memory_space<vmem>>, vector<128x128xbf16>
    %cst_15 = arith.constant dense<0.000000e+00> : vector<8x128xf32>
    %19 = tpu.matmul %17, %18, %cst_15 {dimension_numbers = #tpu.dot_dimension_numbers<[1], [0], [0], [1], [0, 0, 1, 1], [], []>} : vector<8x128xbf16>, vector<128x128xbf16>, vector<8x128xf32> -> vector<8x128xf32>
    %20 = arith.addf %16, %19 : vector<8x128xf32>
    %c0_16 = arith.constant 0 : index
    %c0_17 = arith.constant 0 : index
    %21 = vector.load %arg6[%c0_16, %c0_17] : memref<8x128xf32, #tpu.memory_space<vmem>>, vector<8x128xf32>
    tpu.vector_store %arg6[%c0_16, %c0_17], %20 {strides = array<i32>} : memref<8x128xf32, #tpu.memory_space<vmem>>, vector<8x128xf32>,
    return
  }
  func.func @transform_0(%arg0: i32, %arg1: i32) -> (i32, i32) {
    %c0_i32 = arith.constant 0 : i32
    %c0_i32_0 = arith.constant 0 : i32
    %c0_i32_1 = arith.constant 0 : i32
    return %c0_i32, %c0_i32_0 : i32, i32
  }
  func.func @transform_1(%arg0: i32, %arg1: i32) -> (i32, i32) {
    %c0_i32 = arith.constant 0 : i32
    return %arg0, %arg1 : i32, i32
  }
  func.func @transform_2(%arg0: i32, %arg1: i32) -> (i32, i32) {
    %c1_i32 = arith.constant 1 : i32
    %0 = arith.muli %arg1, %c1_i32 : i32
    %c1_i32_0 = arith.constant 1 : i32
    %1 = arith.subi %0, %c1_i32_0 : i32
    %c0_i32 = arith.constant 0 : i32
    %2 = arith.maxsi %1, %c0_i32 : i32
    %c0_i32_1 = arith.constant 0 : i32
    return %arg0, %2 : i32, i32
  }
  func.func @transform_3(%arg0: i32, %arg1: i32) -> (i32, i32) {
    %c1_i32 = arith.constant 1 : i32
    %0 = arith.addi %arg1, %c1_i32 : i32
    %c1_i32_0 = arith.constant 1 : i32
    %1 = arith.muli %0, %c1_i32_0 : i32
    %c0_i32 = arith.constant 0 : i32
    %2 = arith.minsi %1, %c0_i32 : i32
    %c0_i32_1 = arith.constant 0 : i32
    return %arg0, %2 : i32, i32
  }
  func.func @transform_4(%arg0: i32, %arg1: i32) -> (i32, i32) {
    %c0_i32 = arith.constant 0 : i32
    return %arg0, %arg1 : i32, i32
  }
}

</mosaic_0001>

<llo_original>
// kernel: tpu_custom_call.1
$region0: #{tpu_custom_call.1}
  #allocation0 [shape = 'u32[]', space=smem, size = 0x4, offset = 0x4, fixed_abs, tag = 'smem constant byte address 0x4 - core index']
  #allocation1 [shape = 'u32[72,128]{1,0:T(1,128)}', space=vmem, size = 0x9000, scoped, tag = 'internal scratch']
  #allocation2 [shape = 'bf16[8,128]{1,0:T(8,128)(2,1)}', space=vmem, size = 0x800, scoped, tag = 'scratch operand']
  #allocation3 [shape = 'bf16[8,128]{1,0:T(8,128)(2,1)}', space=vmem, size = 0x800, scoped, tag = 'scratch operand']
  %s0 = inlined_call_operand.hbm [shape: bf16[384,128], index: 0, kind: input, shape index: {}]
  %s1 = inlined_call_operand.hbm [shape: f32[8,64], index: 1, kind: input, shape index: {}]
  %s2 = inlined_call_operand.hbm [shape: f32[8,64], index: 2, kind: input, shape index: {}]
  %s3 = inlined_call_operand.hbm [shape: f32[8,64], index: 3, kind: input, shape index: {}]
  %s4 = inlined_call_operand.hbm [shape: f32[8,64], index: 4, kind: output, shape index: {}]
  %s5 = sld [smem:[#allocation0]]
  $region54: #{tpu_custom_call.1} parent=0
    _
  %s7 = ssub.s32 1, %s5
  %s8 = scalar_select 0, %s7, %s5
  $region1: #{tpu_custom_call.1} parent=0
    #allocation4 [shape = 'u8[98304]{0}', space=vmem, size = 0x18000, scoped, tag = 'input window, operand 0, single buffered']
    #allocation5 [shape = 's32[1]{0}', space=sflag, size = 0x4, scoped, tag = 'scoped memory for tpu_custom_call.1']
    #allocation6 [shape = 's32[1]{0}', space=sflag, size = 0x4, scoped, tag = 'scoped memory for tpu_custom_call.1']
    #allocation7 [shape = 'u8[4096]{0}', space=vmem, size = 0x1000, scoped, tag = 'input window, operand 1, single buffered']
    #allocation8 [shape = 's32[1]{0}', space=sflag, size = 0x4, scoped, tag = 'scoped memory for tpu_custom_call.1']
    #allocation9 [shape = 'u8[4096]{0}', space=vmem, size = 0x1000, scoped, tag = 'input window, operand 2, single buffered']
    #allocation10 [shape = 'u8[4096]{0}', space=vmem, size = 0x1000, scoped, tag = 'input window, operand 3, single buffered']
    #allocation11 [shape = 's32[1]{0}', space=sflag, size = 0x4, scoped, tag = 'scoped memory for tpu_custom_call.1']
    #allocation12 [shape = 'u8[4096]{0}', space=vmem, size = 0x1000, scoped, tag = 'output window, operand 0, single buffered']
    %9 = vsyncpa [#allocation5], 0
    %10 = vsyncpa [#allocation8], 0
    %11 = vsyncpa [#allocation11], 0
    %12 = vsyncpa [#allocation6], 0
    // Predicated region
    $region2: #{tpu_custom_call.1} parent=1 // pred_check
      _
    $region3: #{tpu_custom_call.1} parent=1 // pred_check_branch
      %14 = sbr.rel (0) target = $region5
    $region4: #{tpu_custom_call.1} parent=1 // pred_region
      %16 = vsyncadd [#allocation5], 0
      %s17 = sshll.u32 %s0, 4
      %s18 = int_to_ptr.hbm [resolvable:$true] %s17
      %s19 = sshll.u32 [#allocation4], 4
      %s20 = int_to_ptr.vmem [resolvable:$true] %s19
      %25 = dma.hbm_to_vmem [thread:$0]  %s18, 3072, %s20, [#allocation5], 64, 64, 4
    $region5: #{tpu_custom_call.1} parent=1 // pred_fallthru
      _
    // Predicated region
    $region6: #{tpu_custom_call.1} parent=1 // pred_check
      _
    $region7: #{tpu_custom_call.1} parent=1 // pred_check_branch
      %27 = sbr.rel (0) target = $region9
    $region8: #{tpu_custom_call.1} parent=1 // pred_region
      %29 = vsyncadd [#allocation8], 0
      %s31 = sshll.u32 %s1, 4
      %s32 = int_to_ptr.hbm [resolvable:$true] %s31
      %s33 = sshll.u32 [#allocation7], 4
      %s34 = int_to_ptr.vmem [resolvable:$true] %s33
      %36 = dma.hbm_to_vmem [thread:$0]  %s32, 128, %s34, [#allocation8]
    $region9: #{tpu_custom_call.1} parent=1 // pred_fallthru
      _
    // Predicated region
    $region10: #{tpu_custom_call.1} parent=1 // pred_check
      _
    $region11: #{tpu_custom_call.1} parent=1 // pred_check_branch
      %38 = sbr.rel (0) target = $region13
    $region12: #{tpu_custom_call.1} parent=1 // pred_region
      %s39 = ssub.s32 0, 1
      %p40 = scmp.gt.s32.totalorder %s39, 0
      %s41 = scalar_select %p40, %s39, 0
      %43 = vsyncadd [#allocation8], 0
      %s44 = smul.addr %s41, 8
      %s45 = scalar_lea.hbm %s2, %s44
      %s47 = sshll.u32 %s45, 4
      %s48 = int_to_ptr.hbm [resolvable:$true] %s47
      %s49 = sshll.u32 [#allocation9], 4
      %s50 = int_to_ptr.vmem [resolvable:$true] %s49
      %52 = dma.hbm_to_vmem [thread:$0]  %s48, 128, %s50, [#allocation8]
    $region13: #{tpu_custom_call.1} parent=1 // pred_fallthru
      _
    // Predicated region
    $region14: #{tpu_custom_call.1} parent=1 // pred_check
      _
    $region15: #{tpu_custom_call.1} parent=1 // pred_check_branch
      %54 = sbr.rel (0) target = $region17
    $region16: #{tpu_custom_call.1} parent=1 // pred_region
      %s55 = sadd.s32 0, 1
      %p56 = scmp.lt.s32.totalorder %s55, 0
      %s57 = scalar_select %p56, %s55, 0
      %59 = vsyncadd [#allocation11], 0
      %s60 = smul.addr %s57, 8
      %s61 = scalar_lea.hbm %s3, %s60
      %s63 = sshll.u32 %s61, 4
      %s64 = int_to_ptr.hbm [resolvable:$true] %s63
      %s65 = sshll.u32 [#allocation10], 4
      %s66 = int_to_ptr.vmem [resolvable:$true] %s65
      %68 = dma.hbm_to_vmem [thread:$0]  %s64, 128, %s66, [#allocation11]
    $region17: #{tpu_custom_call.1} parent=1 // pred_fallthru
      _
    // Predicated region
    $region18: #{tpu_custom_call.1} parent=1 // pred_check
      _
    $region19: #{tpu_custom_call.1} parent=1 // pred_check_branch
      %70 = sbr.rel (0) target = $region21
    $region20: #{tpu_custom_call.1} parent=1 // pred_region
      %72 = dma.done [#allocation5], 3072
    $region21: #{tpu_custom_call.1} parent=1 // pred_fallthru
      _
    // Predicated region
    $region22: #{tpu_custom_call.1} parent=1 // pred_check
      _
    $region23: #{tpu_custom_call.1} parent=1 // pred_check_branch
      %74 = sbr.rel (0) target = $region25
    $region24: #{tpu_custom_call.1} parent=1 // pred_region
      %76 = dma.done [#allocation8], 128
    $region25: #{tpu_custom_call.1} parent=1 // pred_fallthru
      _
    // Predicated region
    $region26: #{tpu_custom_call.1} parent=1 // pred_check
      _
    $region27: #{tpu_custom_call.1} parent=1 // pred_check_branch
      %78 = sbr.rel (0) target = $region29
    $region28: #{tpu_custom_call.1} parent=1 // pred_region
      %80 = dma.done [#allocation8], 128
    $region29: #{tpu_custom_call.1} parent=1 // pred_fallthru
      _
    // Predicated region
    $region30: #{tpu_custom_call.1} parent=1 // pred_check
      _
    $region31: #{tpu_custom_call.1} parent=1 // pred_check_branch
      %82 = sbr.rel (0) target = $region33
    $region32: #{tpu_custom_call.1} parent=1 // pred_region
      %84 = dma.done [#allocation11], 128
    $region33: #{tpu_custom_call.1} parent=1 // pred_fallthru
      _
    %s85 = ssub.s32 0, 1
    %p86 = scmp.gt.s32.totalorder %s85, 0
    %s87 = scalar_select %p86, %s85, 0
    %s88 = sadd.s32 0, 1
    %p89 = scmp.lt.s32.totalorder %s88, 0
    %s90 = scalar_select %p89, %s88, 0
    %p91 = scmp.eq.s32.totalorder 0, 0
    // Predicated region
    $region34: #{tpu_custom_call.1} parent=1 // pred_check
      %p92 = pneg %p91
    $region35: #{tpu_custom_call.1} parent=1 // pred_check_branch
      %94 = sbr.rel (%p92) target = $region37
    $region36: #{tpu_custom_call.1} parent=1 // pred_region
      %v95 = vld [vmem:[#allocation7] sm:$0xff]
      %97 = vset.pattern.permute.xlu0 0
      %98 = vperm.xlu0 %97, %v95
      %v99 = vpop.permute.xlu0 %98
      %v101 = vpack.c.bf16 %v99, %v99
      %102 = vst [vmem:[#allocation2] sm:$0xf] %v101
    $region37: #{tpu_custom_call.1} parent=1 // pred_fallthru
      _
    %p103 = scmp.gt.s32.totalorder 0, 0
    // Predicated region
    $region38: #{tpu_custom_call.1} parent=1 // pred_check
      %p104 = pneg %p103
    $region39: #{tpu_custom_call.1} parent=1 // pred_check_branch
      %106 = sbr.rel (%p104) target = $region41
    $region40: #{tpu_custom_call.1} parent=1 // pred_region
      %v107 = vld [vmem:[#allocation9] sm:$0xff]
      %v108 = vpack.c.bf16 %v107, %v107
      %109 = vst [vmem:[#allocation2] sm:$0xf] %v108
    $region41: #{tpu_custom_call.1} parent=1 // pred_fallthru
      _
    // Predicated region
    $region42: #{tpu_custom_call.1} parent=1 // pred_check
      %p110 = pneg %p91
    $region43: #{tpu_custom_call.1} parent=1 // pred_check_branch
      %112 = sbr.rel (%p110) target = $region45
    $region44: #{tpu_custom_call.1} parent=1 // pred_region
      %v113 = vld [vmem:[#allocation7] sm:$0xff]
      %115 = vset.pattern.permute.xlu0 63
      %116 = vperm.xlu0 %115, %v113
      %v117 = vpop.permute.xlu0 %116
      %v119 = vpack.c.bf16 %v117, %v117
      %120 = vst [vmem:[#allocation3] sm:$0xf] %v119
      %vm121 = vcmask 1048064
      %122 = vst.msk [vmem:[#allocation7] sm:$0xff] %vm121, %v117
    $region45: #{tpu_custom_call.1} parent=1 // pred_fallthru
      _
    %v123 = vld [vmem:[#allocation2] sm:$0xf]
    %v124 = vld [vmem:[#allocation4] sm:$0xf]
    %v125 = vld [vmem:[#allocation4 + $0x4] sm:$0xf]
    %v126 = vld [vmem:[#allocation4 + $0x8] sm:$0xf]
    %v127 = vld [vmem:[#allocation4 + $0xc] sm:$0xf]
    %v128 = vld [vmem:[#allocation4 + $0x10] sm:$0xf]
    %v129 = vld [vmem:[#allocation4 + $0x14] sm:$0xf]
    %v130 = vld [vmem:[#allocation4 + $0x18] sm:$0xf]
    %v131 = vld [vmem:[#allocation4 + $0x1c] sm:$0xf]
    %v132 = vld [vmem:[#allocation4 + $0x20] sm:$0xf]
    %v133 = vld [vmem:[#allocation4 + $0x24] sm:$0xf]
    %v134 = vld [vmem:[#allocation4 + $0x28] sm:$0xf]
    %v135 = vld [vmem:[#allocation4 + $0x2c] sm:$0xf]
    %v136 = vld [vmem:[#allocation4 + $0x30] sm:$0xf]
    %v137 = vld [vmem:[#allocation4 + $0x34] sm:$0xf]
    %v138 = vld [vmem:[#allocation4 + $0x38] sm:$0xf]
    %v139 = vld [vmem:[#allocation4 + $0x3c] sm:$0xf]
    %v140 = vld [vmem:[#allocation7] sm:$0xff]
    %v141 = vpack.c.bf16 %v140, %v140
    %v142 = vld [vmem:[#allocation4 + $0x40] sm:$0xf]
    %v143 = vld [vmem:[#allocation4 + $0x44] sm:$0xf]
    %v144 = vld [vmem:[#allocation4 + $0x48] sm:$0xf]
    %v145 = vld [vmem:[#allocation4 + $0x4c] sm:$0xf]
    %v146 = vld [vmem:[#allocation4 + $0x50] sm:$0xf]
    %v147 = vld [vmem:[#allocation4 + $0x54] sm:$0xf]
    %v148 = vld [vmem:[#allocation4 + $0x58] sm:$0xf]
    %v149 = vld [vmem:[#allocation4 + $0x5c] sm:$0xf]
    %v150 = vld [vmem:[#allocation4 + $0x60] sm:$0xf]
    %v151 = vld [vmem:[#allocation4 + $0x64] sm:$0xf]
    %v152 = vld [vmem:[#allocation4 + $0x68] sm:$0xf]
    %v153 = vld [vmem:[#allocation4 + $0x6c] sm:$0xf]
    %v154 = vld [vmem:[#allocation4 + $0x70] sm:$0xf]
    %v155 = vld [vmem:[#allocation4 + $0x74] sm:$0xf]
    %v156 = vld [vmem:[#allocation4 + $0x78] sm:$0xf]
    %v157 = vld [vmem:[#allocation4 + $0x7c] sm:$0xf]
    %v174 = vunpack.c.l.b16 %v142
    %v175 = vunpack.c.l.b16 %v143
    %v176 = vunpack.c.l.b16 %v144
    %v177 = vunpack.c.l.b16 %v145
    %v178 = vunpack.c.l.b16 %v146
    %v179 = vunpack.c.l.b16 %v147
    %v180 = vunpack.c.l.b16 %v148
    %v181 = vunpack.c.l.b16 %v149
    %v182 = vunpack.c.l.b16 %v150
    %v183 = vunpack.c.l.b16 %v151
    %v184 = vunpack.c.l.b16 %v152
    %v185 = vunpack.c.l.b16 %v153
    %v186 = vunpack.c.l.b16 %v154
    %v187 = vunpack.c.l.b16 %v155
    %v188 = vunpack.c.l.b16 %v156
    %v189 = vunpack.c.l.b16 %v157
    %v190 = vpack.c.b16 %v175, %v174
    %v191 = vpack.c.b16 %v177, %v176
    %v192 = vpack.c.b16 %v179, %v178
    %v193 = vpack.c.b16 %v181, %v180
    %v194 = vpack.c.b16 %v183, %v182
    %v195 = vpack.c.b16 %v185, %v184
    %v196 = vpack.c.b16 %v187, %v186
    %v197 = vpack.c.b16 %v189, %v188
    %206 = vmatpush.bf16.msra.mxu0 %v197
    %207 = vmatpush.bf16.msra.mxu0 %v196
    %208 = vmatpush.bf16.msra.mxu0 %v195
    %209 = vmatpush.bf16.msra.mxu0 %v194
    %210 = vmatpush.bf16.msra.mxu0 %v193
    %211 = vmatpush.bf16.msra.mxu0 %v192
    %212 = vmatpush.bf16.msra.mxu0 %v191
    %213 = vmatpush.bf16.msra.mxu0 %v190
    %214 = vmatmul.bf16.gmra.mxu0 %v141
    %v215 = vpop.f32.mrf.mxu0
    %v216 = vadd.f32 0.0, %v215
    %v217 = vpop.f32.mrf.mxu0
    %218 = vdwg.mxu0
    %v235 = vunpack.c.l.b16 %v124
    %v236 = vunpack.c.l.b16 %v125
    %v237 = vunpack.c.l.b16 %v126
    %v238 = vunpack.c.l.b16 %v127
    %v239 = vunpack.c.l.b16 %v128
    %v240 = vunpack.c.l.b16 %v129
    %v241 = vunpack.c.l.b16 %v130
    %v242 = vunpack.c.l.b16 %v131
    %v243 = vunpack.c.l.b16 %v132
    %v244 = vunpack.c.l.b16 %v133
    %v245 = vunpack.c.l.b16 %v134
    %v246 = vunpack.c.l.b16 %v135
    %v247 = vunpack.c.l.b16 %v136
    %v248 = vunpack.c.l.b16 %v137
    %v249 = vunpack.c.l.b16 %v138
    %v250 = vunpack.c.l.b16 %v139
    %v251 = vpack.c.b16 %v236, %v235
    %v252 = vpack.c.b16 %v238, %v237
    %v253 = vpack.c.b16 %v240, %v239
    %v254 = vpack.c.b16 %v242, %v241
    %v255 = vpack.c.b16 %v244, %v243
    %v256 = vpack.c.b16 %v246, %v245
    %v257 = vpack.c.b16 %v248, %v247
    %v258 = vpack.c.b16 %v250, %v249
    %267 = vmatpush.bf16.msra.mxu0 %v258
    %268 = vmatpush.bf16.msra.mxu0 %v257
    %269 = vmatpush.bf16.msra.mxu0 %v256
    %270 = vmatpush.bf16.msra.mxu0 %v255
    %271 = vmatpush.bf16.msra.mxu0 %v254
    %272 = vmatpush.bf16.msra.mxu0 %v253
    %273 = vmatpush.bf16.msra.mxu0 %v252
    %274 = vmatpush.bf16.msra.mxu0 %v251
    %275 = vmatmul.bf16.gmra.mxu0 %v123
    %v276 = vpop.f32.mrf.mxu0
    %v277 = vadd.f32 %v216, %v276
    %v278 = vpop.f32.mrf.mxu0
    %279 = vdwg.mxu0
    %v280 = vld [vmem:[#allocation3] sm:$0xf]
    %v281 = vld [vmem:[#allocation4 + $0x80] sm:$0xf]
    %v282 = vld [vmem:[#allocation4 + $0x84] sm:$0xf]
    %v283 = vld [vmem:[#allocation4 + $0x88] sm:$0xf]
    %v284 = vld [vmem:[#allocation4 + $0x8c] sm:$0xf]
    %v285 = vld [vmem:[#allocation4 + $0x90] sm:$0xf]
    %v286 = vld [vmem:[#allocation4 + $0x94] sm:$0xf]
    %v287 = vld [vmem:[#allocation4 + $0x98] sm:$0xf]
    %v288 = vld [vmem:[#allocation4 + $0x9c] sm:$0xf]
    %v289 = vld [vmem:[#allocation4 + $0xa0] sm:$0xf]
    %v290 = vld [vmem:[#allocation4 + $0xa4] sm:$0xf]
    %v291 = vld [vmem:[#allocation4 + $0xa8] sm:$0xf]
    %v292 = vld [vmem:[#allocation4 + $0xac] sm:$0xf]
    %v293 = vld [vmem:[#allocation4 + $0xb0] sm:$0xf]
    %v294 = vld [vmem:[#allocation4 + $0xb4] sm:$0xf]
    %v295 = vld [vmem:[#allocation4 + $0xb8] sm:$0xf]
    %v296 = vld [vmem:[#allocation4 + $0xbc] sm:$0xf]
    %v313 = vunpack.c.l.b16 %v281
    %v314 = vunpack.c.l.b16 %v282
    %v315 = vunpack.c.l.b16 %v283
    %v316 = vunpack.c.l.b16 %v284
    %v317 = vunpack.c.l.b16 %v285
    %v318 = vunpack.c.l.b16 %v286
    %v319 = vunpack.c.l.b16 %v287
    %v320 = vunpack.c.l.b16 %v288
    %v321 = vunpack.c.l.b16 %v289
    %v322 = vunpack.c.l.b16 %v290
    %v323 = vunpack.c.l.b16 %v291
    %v324 = vunpack.c.l.b16 %v292
    %v325 = vunpack.c.l.b16 %v293
    %v326 = vunpack.c.l.b16 %v294
    %v327 = vunpack.c.l.b16 %v295
    %v328 = vunpack.c.l.b16 %v296
    %v329 = vpack.c.b16 %v314, %v313
    %v330 = vpack.c.b16 %v316, %v315
    %v331 = vpack.c.b16 %v318, %v317
    %v332 = vpack.c.b16 %v320, %v319
    %v333 = vpack.c.b16 %v322, %v321
    %v334 = vpack.c.b16 %v324, %v323
    %v335 = vpack.c.b16 %v326, %v325
    %v336 = vpack.c.b16 %v328, %v327
    %345 = vmatpush.bf16.msra.mxu0 %v336
    %346 = vmatpush.bf16.msra.mxu0 %v335
    %347 = vmatpush.bf16.msra.mxu0 %v334
    %348 = vmatpush.bf16.msra.mxu0 %v333
    %349 = vmatpush.bf16.msra.mxu0 %v332
    %350 = vmatpush.bf16.msra.mxu0 %v331
    %351 = vmatpush.bf16.msra.mxu0 %v330
    %352 = vmatpush.bf16.msra.mxu0 %v329
    %353 = vmatmul.bf16.gmra.mxu0 %v280
    %v354 = vpop.f32.mrf.mxu0
    %v355 = vadd.f32 0.0, %v354
    %v356 = vpop.f32.mrf.mxu0
    %357 = vdwg.mxu0
    %v358 = vadd.f32 %v277, %v355
    %359 = vst [vmem:[#allocation12] sm:$0xff] %v358
    // Predicated region
    $region46: #{tpu_custom_call.1} parent=1 // pred_check
      _
    $region47: #{tpu_custom_call.1} parent=1 // pred_check_branch
      %361 = sbr.rel (0) target = $region49
    $region48: #{tpu_custom_call.1} parent=1 // pred_region
      %363 = vsyncadd [#allocation6], 0
      %s365 = sshll.u32 [#allocation12], 4
      %s366 = int_to_ptr.vmem [resolvable:$true] %s365
      %s367 = sshll.u32 %s4, 4
      %s368 = int_to_ptr.hbm [resolvable:$true] %s367
      %370 = dma.vmem_to_hbm [thread:$0]  %s366, 128, %s368, [#allocation6]
    $region49: #{tpu_custom_call.1} parent=1 // pred_fallthru
      _
    // Predicated region
    $region50: #{tpu_custom_call.1} parent=1 // pred_check
      _
    $region51: #{tpu_custom_call.1} parent=1 // pred_check_branch
      %372 = sbr.rel (0) target = $region53
    $region52: #{tpu_custom_call.1} parent=1 // pred_region
      %374 = dma.done [#allocation6], 128
    $region53: #{tpu_custom_call.1} parent=1 // pred_fallthru
      _
    %375 = vsyncpa [#allocation5], 1
    %376 = vsyncpa [#allocation8], 1
    %377 = vsyncpa [#allocation11], 1
    %378 = vsyncpa [#allocation6], 1

</llo_original>
